<compile_context>
chip_gen: v6e
topology: v6e:2x2x1
jax: 0.10.0
libtpu: 0.0.40
codegen_flags: <defaults>
</compile_context>

<pallas_src>
import jax
import jax.numpy as jnp
from jax.experimental import pallas as pl
from jax.experimental.pallas import tpu as pltpu


def _round_up(a: int, b: int) -> int:
    return (a + b - 1) // b * b


def _ffn_kernel(x_ref, w1_ref, b1_ref, w2_ref, b2_ref, o_ref):
    # x_ref : (tm, Dp)  bf16
    # w1_ref: (Dp, th)  bf16      b1_ref: (1, th) f32
    # w2_ref: (th, Dp)  bf16      b2_ref: (1, Dp) f32
    # o_ref : (tm, Dp)  f32       (resident accumulator across the hidden axis)
    j = pl.program_id(1)

    @pl.when(j == 0)
    def _():
        # Seed the resident output tile with the second-layer bias; every hidden
        # slice then just accumulates its contribution on top.
        o_ref[...] = jnp.broadcast_to(b2_ref[...], o_ref.shape)

    # First linear (this hidden slice): bf16 MXU matmul, f32 accumulate, then
    # bias + GELU in f32 on the VPU/EUP.
    h = jnp.dot(x_ref[...], w1_ref[...], preferred_element_type=jnp.float32)
    h = jax.nn.gelu(h + b1_ref[...], approximate=True)

    # Second linear: accumulate this hidden slice's contribution into the output.
    o_ref[...] += jnp.dot(
        h.astype(jnp.bfloat16), w2_ref[...], preferred_element_type=jnp.float32
    )


def feed_forward(x, w1, b1, w2, b2, *, tm_max=256):
    """out = GELU(x @ w1 + b1) @ w2 + b2, fused in one Pallas kernel.

    x : (..., D) float32
    w1: (D, H)   float32    b1: (H,) float32
    w2: (H, D)   float32    b2: (D,) float32
    """
    *lead, D = x.shape
    H = w1.shape[1]
    M = 1
    for s in lead:
        M *= s

    # ---- tile / padding selection -------------------------------------------------
    Dp = _round_up(D, 128)                                   # lane-dense feature dim
    Hp = _round_up(H, 128)
    th = next(t for t in (1024, 512, 256, 128) if Hp % t == 0)  # hidden (streamed) tile
    tm = min(tm_max, _round_up(M, 8))                        # row tile (multiple of 8)
    Mp = _round_up(M, tm)

    # ---- prepare operands (bf16 matmul inputs, f32 biases), zero-pad --------------
    x2 = jnp.pad(x.reshape(M, D).astype(jnp.bfloat16), ((0, Mp - M), (0, Dp - D)))
    w1b = jnp.pad(w1.astype(jnp.bfloat16), ((0, Dp - D), (0, Hp - H)))
    w2b = jnp.pad(w2.astype(jnp.bfloat16), ((0, Hp - H), (0, Dp - D)))
    b1p = jnp.pad(b1.astype(jnp.float32), (0, Hp - H)).reshape(1, Hp)
    b2p = jnp.pad(b2.astype(jnp.float32), (0, Dp - D)).reshape(1, Dp)

    grid = (Mp // tm, Hp // th)

    # ---- VMEM budget (double-buffered inputs/outputs) + headroom ------------------
    in_bytes = tm * Dp * 2 + Dp * th * 2 + th * Dp * 2 + 8 * th * 4 + 8 * Dp * 4
    out_bytes = tm * Dp * 4
    vmem_need = 2 * (in_bytes + out_bytes)
    vmem_limit = int(max(16 * 1024 * 1024, vmem_need * 3 // 2 + (2 << 20)))

    cost = pl.CostEstimate(
        flops=4 * M * D * H,                     # two (M,D,H) matmuls
        transcendentals=M * H,                   # tanh in GELU
        bytes_accessed=Mp * Dp * 2 + Dp * Hp * 2 + Hp * Dp * 2
        + (Hp + Dp) * 4 + Mp * Dp * 4,
    )

    out = pl.pallas_call(
        _ffn_kernel,
        out_shape=jax.ShapeDtypeStruct((Mp, Dp), jnp.float32),
        grid_spec=pltpu.PrefetchScalarGridSpec(
            num_scalar_prefetch=0,
            grid=grid,
            in_specs=[
                pl.BlockSpec((tm, Dp), lambda i, j: (i, 0)),   # x row tile (resident over j)
                pl.BlockSpec((Dp, th), lambda i, j: (0, j)),   # w1 hidden slice
                pl.BlockSpec((1, th), lambda i, j: (0, j)),    # b1 hidden slice
                pl.BlockSpec((th, Dp), lambda i, j: (j, 0)),   # w2 hidden slice
                pl.BlockSpec((1, Dp), lambda i, j: (0, 0)),    # b2
            ],
            out_specs=pl.BlockSpec((tm, Dp), lambda i, j: (i, 0)),
        ),
        compiler_params=pltpu.CompilerParams(
            dimension_semantics=("parallel", "arbitrary"),
            vmem_limit_bytes=vmem_limit,
        ),
        cost_estimate=cost,
    )(x2, w1b, b1p, w2b, b2p)

    return out[:M, :D].reshape(*lead, D).astype(x.dtype)


def reference(x, w1, b1, w2, b2):
    """Same math / same precision strategy (bf16 matmul inputs, f32 accumulate)."""
    M = x.reshape(-1, x.shape[-1]).shape[0]
    xb = x.reshape(M, x.shape[-1]).astype(jnp.bfloat16)
    h = jnp.dot(xb, w1.astype(jnp.bfloat16), preferred_element_type=jnp.float32)
    h = jax.nn.gelu(h + b1.astype(jnp.float32), approximate=True)
    o = jnp.dot(h.astype(jnp.bfloat16), w2.astype(jnp.bfloat16),
                preferred_element_type=jnp.float32) + b2.astype(jnp.float32)
    return o.reshape(x.shape).astype(x.dtype)


if __name__ == "__main__":
    # Small shapes: batch=2, seq=8, dim=32, hidden_dim=128 (4*dim)
    B, N, D, Hd = 2, 8, 32, 128
    key = jax.random.PRNGKey(0)
    kx, k1, kb1, k2, kb2 = jax.random.split(key, 5)

    x = jax.random.normal(kx, (B, N, D), dtype=jnp.float32)
    # Deterministic synthetic parameters (no checkpoint load)
    w1 = jax.random.normal(k1, (D, Hd), dtype=jnp.float32) * (1.0 / jnp.sqrt(D))
    b1 = jax.random.normal(kb1, (Hd,), dtype=jnp.float32) * 0.01
    w2 = jax.random.normal(k2, (Hd, D), dtype=jnp.float32) * (1.0 / jnp.sqrt(Hd))
    b2 = jax.random.normal(kb2, (D,), dtype=jnp.float32) * 0.01

    out = feed_forward(x, w1, b1, w2, b2)
    out = jax.block_until_ready(out)

    ref = reference(x, w1, b1, w2, b2)
    assert out.shape == (B, N, D)
    assert jnp.allclose(out, ref, atol=2e-3, rtol=2e-3), "mismatch vs reference"

    print("KERNEL_OK")
</pallas_src>

<mosaic_0001>
module attributes {stable_mosaic.version = 11 : i64} {
  func.func @_ffn_kernel(%arg0: i32, %arg1: i32, %arg2: memref<16x128xbf16, #tpu.memory_space<vmem>>, %arg3: memref<128x128xbf16, #tpu.memory_space<vmem>>, %arg4: memref<1x128xf32, #tpu.memory_space<vmem>>, %arg5: memref<128x128xbf16, #tpu.memory_space<vmem>>, %arg6: memref<1x128xf32, #tpu.memory_space<vmem>>, %arg7: memref<16x128xf32, #tpu.memory_space<vmem>>) attributes {dimension_semantics = [#tpu.dimension_semantics<parallel>, #tpu.dimension_semantics<arbitrary>], iteration_bounds = array<i64: 1, 1>, scalar_prefetch = 0 : i64, scratch_operands = 0 : i64, tpu.core_type = #tpu.core_type<tc>, window_params = [{transform_indices = @transform_0, window_bounds = array<i64: 16, 128>}, {transform_indices = @transform_1, window_bounds = array<i64: 128, 128>}, {transform_indices = @transform_2, window_bounds = array<i64: 1, 128>}, {transform_indices = @transform_3, window_bounds = array<i64: 128, 128>}, {pipeline_mode = #tpu.pipeline_mode<synchronous>, transform_indices = @transform_4, window_bounds = array<i64: 1, 128>}, {transform_indices = @transform_5, window_bounds = array<i64: 16, 128>}]} {
    %c0_i32 = arith.constant 0 : i32
    %0 = arith.cmpi eq, %arg1, %c0_i32 : i32
    %1 = arith.extui %0 : i1 to i32
    %c0_i32_0 = arith.constant 0 : i32
    %2 = arith.cmpi ne, %1, %c0_i32_0 : i32
    scf.if %2 {
      %c0_17 = arith.constant 0 : index
      %c0_18 = arith.constant 0 : index
      %28 = vector.load %arg6[%c0_17, %c0_18] : memref<1x128xf32, #tpu.memory_space<vmem>>, vector<1x128xf32>
      %29 = vector.shape_cast %28 : vector<1x128xf32> to vector<1x128xf32>
      %30 = vector.broadcast %29 : vector<1x128xf32> to vector<16x128xf32>
      %c0_19 = arith.constant 0 : index
      %c0_20 = arith.constant 0 : index
      %31 = vector.load %arg7[%c0_19, %c0_20] : memref<16x128xf32, #tpu.memory_space<vmem>>, vector<16x128xf32>
      tpu.vector_store %arg7[%c0_19, %c0_20], %30 {strides = array<i32>} : memref<16x128xf32, #tpu.memory_space<vmem>>, vector<16x128xf32>,
    } else {
    }
    %c0 = arith.constant 0 : index
    %c0_1 = arith.constant 0 : index
    %3 = vector.load %arg2[%c0, %c0_1] : memref<16x128xbf16, #tpu.memory_space<vmem>>, vector<16x128xbf16>
    %c0_2 = arith.constant 0 : index
    %c0_3 = arith.constant 0 : index
    %4 = vector.load %arg3[%c0_2, %c0_3] : memref<128x128xbf16, #tpu.memory_space<vmem>>, vector<128x128xbf16>
    %cst = arith.constant dense<0.000000e+00> : vector<16x128xf32>
    %5 = tpu.matmul %3, %4, %cst {dimension_numbers = #tpu.dot_dimension_numbers<[1], [0], [0], [1], [0, 0, 1, 1], [], []>} : vector<16x128xbf16>, vector<128x128xbf16>, vector<16x128xf32> -> vector<16x128xf32>
    %c0_4 = arith.constant 0 : index
    %c0_5 = arith.constant 0 : index
    %6 = vector.load %arg4[%c0_4, %c0_5] : memref<1x128xf32, #tpu.memory_space<vmem>>, vector<1x128xf32>
    %7 = vector.broadcast %6 : vector<1x128xf32> to vector<16x128xf32>
    %8 = arith.addf %5, %7 : vector<16x128xf32>
    %9 = arith.mulf %8, %8 : vector<16x128xf32>
    %10 = arith.mulf %8, %9 : vector<16x128xf32>
    %cst_6 = arith.constant 4.471500e-02 : f32
    %11 = vector.broadcast %cst_6 : f32 to vector<16x128xf32>
    %12 = arith.mulf %11, %10 : vector<16x128xf32>
    %13 = arith.addf %8, %12 : vector<16x128xf32>
    %cst_7 = arith.constant 0.797884583 : f32
    %14 = vector.broadcast %cst_7 : f32 to vector<16x128xf32>
    %15 = arith.mulf %14, %13 : vector<16x128xf32>
    %16 = math.tanh %15 : vector<16x128xf32>
    %cst_8 = arith.constant 1.000000e+00 : f32
    %17 = vector.broadcast %cst_8 : f32 to vector<16x128xf32>
    %18 = arith.addf %17, %16 : vector<16x128xf32>
    %cst_9 = arith.constant 5.000000e-01 : f32
    %19 = vector.broadcast %cst_9 : f32 to vector<16x128xf32>
    %20 = arith.mulf %19, %18 : vector<16x128xf32>
    %21 = arith.mulf %8, %20 : vector<16x128xf32>
    %c0_10 = arith.constant 0 : index
    %c0_11 = arith.constant 0 : index
    %22 = vector.load %arg7[%c0_10, %c0_11] : memref<16x128xf32, #tpu.memory_space<vmem>>, vector<16x128xf32>
    %23 = arith.truncf %21 : vector<16x128xf32> to vector<16x128xbf16>
    %c0_12 = arith.constant 0 : index
    %c0_13 = arith.constant 0 : index
    %24 = vector.load %arg5[%c0_12, %c0_13] : memref<128x128xbf16, #tpu.memory_space<vmem>>, vector<128x128xbf16>
    %cst_14 = arith.constant dense<0.000000e+00> : vector<16x128xf32>
    %25 = tpu.matmul %23, %24, %cst_14 {dimension_numbers = #tpu.dot_dimension_numbers<[1], [0], [0], [1], [0, 0, 1, 1], [], []>} : vector<16x128xbf16>, vector<128x128xbf16>, vector<16x128xf32> -> vector<16x128xf32>
    %26 = arith.addf %22, %25 : vector<16x128xf32>
    %c0_15 = arith.constant 0 : index
    %c0_16 = arith.constant 0 : index
    %27 = vector.load %arg7[%c0_15, %c0_16] : memref<16x128xf32, #tpu.memory_space<vmem>>, vector<16x128xf32>
    tpu.vector_store %arg7[%c0_15, %c0_16], %26 {strides = array<i32>} : memref<16x128xf32, #tpu.memory_space<vmem>>, vector<16x128xf32>,
    return
  }
  func.func @transform_0(%arg0: i32, %arg1: i32) -> (i32, i32) {
    %c0_i32 = arith.constant 0 : i32
    %c0_i32_0 = arith.constant 0 : i32
    return %arg0, %c0_i32 : i32, i32
  }
  func.func @transform_1(%arg0: i32, %arg1: i32) -> (i32, i32) {
    %c0_i32 = arith.constant 0 : i32
    %c0_i32_0 = arith.constant 0 : i32
    return %c0_i32, %arg1 : i32, i32
  }
  func.func @transform_2(%arg0: i32, %arg1: i32) -> (i32, i32) {
    %c0_i32 = arith.constant 0 : i32
    %c0_i32_0 = arith.constant 0 : i32
    return %c0_i32, %arg1 : i32, i32
  }
  func.func @transform_3(%arg0: i32, %arg1: i32) -> (i32, i32) {
    %c0_i32 = arith.constant 0 : i32
    %c0_i32_0 = arith.constant 0 : i32
    return %arg1, %c0_i32 : i32, i32
  }
  func.func @transform_4(%arg0: i32, %arg1: i32) -> (i32, i32) {
    %c0_i32 = arith.constant 0 : i32
    %c0_i32_0 = arith.constant 0 : i32
    %c0_i32_1 = arith.constant 0 : i32
    return %c0_i32, %c0_i32_0 : i32, i32
  }
  func.func @transform_5(%arg0: i32, %arg1: i32) -> (i32, i32) {
    %c0_i32 = arith.constant 0 : i32
    %c0_i32_0 = arith.constant 0 : i32
    return %arg0, %c0_i32 : i32, i32
  }
}

</mosaic_0001>

<llo_original>
// kernel: tpu_custom_call.1
$region0: #{tpu_custom_call.1}
  #allocation0 [shape = 'u32[]', space=smem, size = 0x4, offset = 0x4, fixed_abs, tag = 'smem constant byte address 0x4 - core index']
  #allocation1 [shape = 'u32[144,128]{1,0:T(1,128)}', space=vmem, size = 0x12000, scoped, tag = 'internal scratch']
  %s0 = inlined_call_operand.hbm [shape: bf16[16,128], index: 0, kind: input, shape index: {}]
  %s1 = inlined_call_operand.hbm [shape: bf16[128,128], index: 1, kind: input, shape index: {}]
  %s2 = inlined_call_operand.vmem [shape: f32[1,128], index: 2, kind: input, shape index: {}]
  %s3 = inlined_call_operand.hbm [shape: bf16[128,128], index: 3, kind: input, shape index: {}]
  %s4 = inlined_call_operand.vmem [shape: f32[1,128], index: 4, kind: input, shape index: {}]
  %s5 = inlined_call_operand.hbm [shape: f32[16,128], index: 5, kind: output, shape index: {}]
  %s6 = sld [smem:[#allocation0]]
  $region46: #{tpu_custom_call.1} parent=0
    _
  %s8 = ssub.s32 1, %s6
  %s9 = scalar_select 0, %s8, %s6
  $region1: #{tpu_custom_call.1} parent=0
    #allocation2 [shape = 'u8[4096]{0}', space=vmem, size = 0x1000, scoped, tag = 'input window, operand 0, single buffered']
    #allocation3 [shape = 's32[1]{0}', space=sflag, size = 0x4, scoped, tag = 'scoped memory for tpu_custom_call.1']
    #allocation4 [shape = 's32[1]{0}', space=sflag, size = 0x4, scoped, tag = 'scoped memory for tpu_custom_call.1']
    #allocation5 [shape = 'u8[32768]{0}', space=vmem, size = 0x8000, scoped, tag = 'input window, operand 1, single buffered']
    #allocation6 [shape = 's32[1]{0}', space=sflag, size = 0x4, scoped, tag = 'scoped memory for tpu_custom_call.1']
    #allocation7 [shape = 'u8[32768]{0}', space=vmem, size = 0x8000, scoped, tag = 'input window, operand 3, single buffered']
    #allocation8 [shape = 'u8[8192]{0}', space=vmem, size = 0x2000, scoped, tag = 'output window, operand 0, single buffered']
    %10 = vsyncpa [#allocation3], 0
    %11 = vsyncpa [#allocation6], 0
    %12 = vsyncpa [#allocation4], 0
    // Predicated region
    $region2: #{tpu_custom_call.1} parent=1 // pred_check
      _
    $region3: #{tpu_custom_call.1} parent=1 // pred_check_branch
      %14 = sbr.rel (0) target = $region5
    $region4: #{tpu_custom_call.1} parent=1 // pred_region
      %s16 = ssub.s32 128, 128
      %17 = vsyncadd [#allocation3], %s16
      %s18 = sshll.u32 [#allocation2], 4
      %s19 = int_to_ptr.vmem [resolvable:$true] %s18
      %24 = dma.hbm_to_vmem [thread:$0]  %s0, 128, %s19, [#allocation3], 64, 64, 4
    $region5: #{tpu_custom_call.1} parent=1 // pred_fallthru
      _
    // Predicated region
    $region6: #{tpu_custom_call.1} parent=1 // pred_check
      _
    $region7: #{tpu_custom_call.1} parent=1 // pred_check_branch
      %26 = sbr.rel (0) target = $region9
    $region8: #{tpu_custom_call.1} parent=1 // pred_region
      %s28 = ssub.s32 1024, 1024
      %29 = vsyncadd [#allocation6], %s28
      %s30 = sshll.u32 [#allocation5], 4
      %s31 = int_to_ptr.vmem [resolvable:$true] %s30
      %36 = dma.hbm_to_vmem [thread:$0]  %s1, 1024, %s31, [#allocation6], 64, 64, 4
    $region9: #{tpu_custom_call.1} parent=1 // pred_fallthru
      _
    // Predicated region
    $region10: #{tpu_custom_call.1} parent=1 // pred_check
      _
    $region11: #{tpu_custom_call.1} parent=1 // pred_check_branch
      %38 = sbr.rel (0) target = $region13
    $region12: #{tpu_custom_call.1} parent=1 // pred_region
      _
    $region13: #{tpu_custom_call.1} parent=1 // pred_fallthru
      _
    // Predicated region
    $region14: #{tpu_custom_call.1} parent=1 // pred_check
      _
    $region15: #{tpu_custom_call.1} parent=1 // pred_check_branch
      %40 = sbr.rel (0) target = $region17
    $region16: #{tpu_custom_call.1} parent=1 // pred_region
      %s42 = ssub.s32 1024, 1024
      %43 = vsyncadd [#allocation6], %s42
      %s44 = sshll.u32 [#allocation7], 4
      %s45 = int_to_ptr.vmem [resolvable:$true] %s44
      %50 = dma.hbm_to_vmem [thread:$0]  %s3, 1024, %s45, [#allocation6], 64, 64, 4
    $region17: #{tpu_custom_call.1} parent=1 // pred_fallthru
      _
    // Predicated region
    $region18: #{tpu_custom_call.1} parent=1 // pred_check
      _
    $region19: #{tpu_custom_call.1} parent=1 // pred_check_branch
      %52 = sbr.rel (0) target = $region21
    $region20: #{tpu_custom_call.1} parent=1 // pred_region
      _
    $region21: #{tpu_custom_call.1} parent=1 // pred_fallthru
      _
    // Predicated region
    $region22: #{tpu_custom_call.1} parent=1 // pred_check
      _
    $region23: #{tpu_custom_call.1} parent=1 // pred_check_branch
      %54 = sbr.rel (0) target = $region25
    $region24: #{tpu_custom_call.1} parent=1 // pred_region
      %55 = dma.done [#allocation3], 128
    $region25: #{tpu_custom_call.1} parent=1 // pred_fallthru
      _
    // Predicated region
    $region26: #{tpu_custom_call.1} parent=1 // pred_check
      _
    $region27: #{tpu_custom_call.1} parent=1 // pred_check_branch
      %57 = sbr.rel (0) target = $region29
    $region28: #{tpu_custom_call.1} parent=1 // pred_region
      %58 = dma.done [#allocation6], 1024
    $region29: #{tpu_custom_call.1} parent=1 // pred_fallthru
      _
    // Predicated region
    $region30: #{tpu_custom_call.1} parent=1 // pred_check
      _
    $region31: #{tpu_custom_call.1} parent=1 // pred_check_branch
      %60 = sbr.rel (0) target = $region33
    $region32: #{tpu_custom_call.1} parent=1 // pred_region
      %61 = dma.done [#allocation6], 1024
    $region33: #{tpu_custom_call.1} parent=1 // pred_fallthru
      _
    %p63 = scmp.eq.s32.totalorder 0, 0
    // Predicated region
    $region34: #{tpu_custom_call.1} parent=1 // pred_check
      %p64 = pneg %p63
    $region35: #{tpu_custom_call.1} parent=1 // pred_check_branch
      %66 = sbr.rel (%p64) target = $region37
    $region36: #{tpu_custom_call.1} parent=1 // pred_region
      %v67 = vld [vmem:[%s4] sm:$0x1]
      %v69 = vlaneseq
      %v70 = vshrl.u32 %v69, 7
      %v71 = vsub.s32 0, %v70
      %v72 = vrot.slane %v67, %v71
      %74 = vst [vmem:[#allocation8] sm:$0xff] %v72
      %75 = vst [vmem:[#allocation8 + $0x8] sm:$0xff] %v72
    $region37: #{tpu_custom_call.1} parent=1 // pred_fallthru
      _
    %v76 = vld [vmem:[#allocation2] sm:$0xf]
    %v77 = vld [vmem:[#allocation2 + $0x4] sm:$0xf]
    %v78 = vld [vmem:[#allocation5] sm:$0xf]
    %v79 = vld [vmem:[#allocation5 + $0x4] sm:$0xf]
    %v80 = vld [vmem:[#allocation5 + $0x8] sm:$0xf]
    %v81 = vld [vmem:[#allocation5 + $0xc] sm:$0xf]
    %v82 = vld [vmem:[#allocation5 + $0x10] sm:$0xf]
    %v83 = vld [vmem:[#allocation5 + $0x14] sm:$0xf]
    %v84 = vld [vmem:[#allocation5 + $0x18] sm:$0xf]
    %v85 = vld [vmem:[#allocation5 + $0x1c] sm:$0xf]
    %v86 = vld [vmem:[#allocation5 + $0x20] sm:$0xf]
    %v87 = vld [vmem:[#allocation5 + $0x24] sm:$0xf]
    %v88 = vld [vmem:[#allocation5 + $0x28] sm:$0xf]
    %v89 = vld [vmem:[#allocation5 + $0x2c] sm:$0xf]
    %v90 = vld [vmem:[#allocation5 + $0x30] sm:$0xf]
    %v91 = vld [vmem:[#allocation5 + $0x34] sm:$0xf]
    %v92 = vld [vmem:[#allocation5 + $0x38] sm:$0xf]
    %v93 = vld [vmem:[#allocation5 + $0x3c] sm:$0xf]
    %v94 = vld [vmem:[%s2] sm:$0x1]
    %v96 = vlaneseq
    %v97 = vshrl.u32 %v96, 7
    %v98 = vsub.s32 0, %v97
    %v99 = vrot.slane %v94, %v98
    %v103 = vunpack.c.l.b16 %v76
    %v104 = vunpack.c.l.b16 %v77
    %v105 = vpack.c.b16 %v104, %v103
    %v123 = vunpack.c.l.b16 %v78
    %v124 = vunpack.c.l.b16 %v79
    %v125 = vunpack.c.l.b16 %v80
    %v126 = vunpack.c.l.b16 %v81
    %v127 = vunpack.c.l.b16 %v82
    %v128 = vunpack.c.l.b16 %v83
    %v129 = vunpack.c.l.b16 %v84
    %v130 = vunpack.c.l.b16 %v85
    %v131 = vunpack.c.l.b16 %v86
    %v132 = vunpack.c.l.b16 %v87
    %v133 = vunpack.c.l.b16 %v88
    %v134 = vunpack.c.l.b16 %v89
    %v135 = vunpack.c.l.b16 %v90
    %v136 = vunpack.c.l.b16 %v91
    %v137 = vunpack.c.l.b16 %v92
    %v138 = vunpack.c.l.b16 %v93
    %v139 = vpack.c.b16 %v124, %v123
    %v140 = vpack.c.b16 %v126, %v125
    %v141 = vpack.c.b16 %v128, %v127
    %v142 = vpack.c.b16 %v130, %v129
    %v143 = vpack.c.b16 %v132, %v131
    %v144 = vpack.c.b16 %v134, %v133
    %v145 = vpack.c.b16 %v136, %v135
    %v146 = vpack.c.b16 %v138, %v137
    %155 = vmatprep.subr.bf16.mxu0 0
    %156 = vmatpush1.bf16.msra.mxu0 %v146
    %157 = vmatprep.subr.bf16.mxu0 0
    %158 = vmatpush1.bf16.msra.mxu0 %v145
    %159 = vmatprep.subr.bf16.mxu0 0
    %160 = vmatpush1.bf16.msra.mxu0 %v144
    %161 = vmatprep.subr.bf16.mxu0 0
    %162 = vmatpush1.bf16.msra.mxu0 %v143
    %163 = vmatprep.subr.bf16.mxu0 0
    %164 = vmatpush1.bf16.msra.mxu0 %v142
    %165 = vmatprep.subr.bf16.mxu0 0
    %166 = vmatpush1.bf16.msra.mxu0 %v141
    %167 = vmatprep.subr.bf16.mxu0 0
    %168 = vmatpush1.bf16.msra.mxu0 %v140
    %169 = vmatprep.subr.bf16.mxu0 0
    %170 = vmatpush1.bf16.msra.mxu0 %v139
    %171 = vmatprep.subr.bf16.mxu0 0
    %172 = vmatpush2.bf16.msra.mxu0 0
    %173 = vmatprep.subr.bf16.mxu0 0
    %174 = vmatpush2.bf16.msra.mxu0 0
    %175 = vmatprep.subr.bf16.mxu0 0
    %176 = vmatpush2.bf16.msra.mxu0 0
    %177 = vmatprep.subr.bf16.mxu0 0
    %178 = vmatpush2.bf16.msra.mxu0 0
    %179 = vmatprep.subr.bf16.mxu0 0
    %180 = vmatpush2.bf16.msra.mxu0 0
    %181 = vmatprep.subr.bf16.mxu0 0
    %182 = vmatpush2.bf16.msra.mxu0 0
    %183 = vmatprep.subr.bf16.mxu0 0
    %184 = vmatpush2.bf16.msra.mxu0 0
    %185 = vmatprep.subr.bf16.mxu0 0
    %186 = vmatpush2.bf16.msra.mxu0 0
    %187 = vmatprep.mubr.bf16.mxu0 0
    %188 = vmatmul.mubr.bf16.gmra.mxu0 %v105
    %v189 = vpop.f32.mrf.mxu0
    %v190 = vadd.f32 %v99, %v189
    %v191 = vpop.f32.mrf.mxu0
    %v192 = vpop.f32.mrf.mxu0
    %v193 = vadd.f32 %v99, %v192
    %v194 = vpop.f32.mrf.mxu0
    %195 = vdwg.mxu0
    %v196 = vmul.f32 %v190, %v190
    %v197 = vmul.f32 %v193, %v193
    %v198 = vmul.f32 %v190, %v196
    %v199 = vmul.f32 %v193, %v197
    %v200 = vmul.f32 %v198, 0.044715
    %v201 = vmul.f32 %v199, 0.044715
    %v202 = vadd.f32 %v190, %v200
    %v203 = vadd.f32 %v193, %v201
    %v204 = vmul.f32 %v202, 0.7978846
    %v205 = vmul.f32 %v203, 0.7978846
    %v206 = vtanh.pop %v204
    %v207 = vtanh.pop %v205
    %v208 = vadd.f32 %v206, 1.0
    %v209 = vadd.f32 %v207, 1.0
    %v210 = vmul.f32 %v208, 0.5
    %v211 = vmul.f32 %v209, 0.5
    %v212 = vmul.f32 %v190, %v210
    %v213 = vmul.f32 %v193, %v211
    %v214 = vld [vmem:[#allocation8] sm:$0xff]
    %v215 = vld [vmem:[#allocation8 + $0x8] sm:$0xff]
    %v216 = vpack.c.bf16 %v213, %v212
    %v217 = vld [vmem:[#allocation7] sm:$0xf]
    %v218 = vld [vmem:[#allocation7 + $0x4] sm:$0xf]
    %v219 = vld [vmem:[#allocation7 + $0x8] sm:$0xf]
    %v220 = vld [vmem:[#allocation7 + $0xc] sm:$0xf]
    %v221 = vld [vmem:[#allocation7 + $0x10] sm:$0xf]
    %v222 = vld [vmem:[#allocation7 + $0x14] sm:$0xf]
    %v223 = vld [vmem:[#allocation7 + $0x18] sm:$0xf]
    %v224 = vld [vmem:[#allocation7 + $0x1c] sm:$0xf]
    %v225 = vld [vmem:[#allocation7 + $0x20] sm:$0xf]
    %v226 = vld [vmem:[#allocation7 + $0x24] sm:$0xf]
    %v227 = vld [vmem:[#allocation7 + $0x28] sm:$0xf]
    %v228 = vld [vmem:[#allocation7 + $0x2c] sm:$0xf]
    %v229 = vld [vmem:[#allocation7 + $0x30] sm:$0xf]
    %v230 = vld [vmem:[#allocation7 + $0x34] sm:$0xf]
    %v231 = vld [vmem:[#allocation7 + $0x38] sm:$0xf]
    %v232 = vld [vmem:[#allocation7 + $0x3c] sm:$0xf]
    %v249 = vunpack.c.l.b16 %v217
    %v250 = vunpack.c.l.b16 %v218
    %v251 = vunpack.c.l.b16 %v219
    %v252 = vunpack.c.l.b16 %v220
    %v253 = vunpack.c.l.b16 %v221
    %v254 = vunpack.c.l.b16 %v222
    %v255 = vunpack.c.l.b16 %v223
    %v256 = vunpack.c.l.b16 %v224
    %v257 = vunpack.c.l.b16 %v225
    %v258 = vunpack.c.l.b16 %v226
    %v259 = vunpack.c.l.b16 %v227
    %v260 = vunpack.c.l.b16 %v228
    %v261 = vunpack.c.l.b16 %v229
    %v262 = vunpack.c.l.b16 %v230
    %v263 = vunpack.c.l.b16 %v231
    %v264 = vunpack.c.l.b16 %v232
    %v265 = vpack.c.b16 %v250, %v249
    %v266 = vpack.c.b16 %v252, %v251
    %v267 = vpack.c.b16 %v254, %v253
    %v268 = vpack.c.b16 %v256, %v255
    %v269 = vpack.c.b16 %v258, %v257
    %v270 = vpack.c.b16 %v260, %v259
    %v271 = vpack.c.b16 %v262, %v261
    %v272 = vpack.c.b16 %v264, %v263
    %281 = vmatprep.subr.bf16.mxu0 0
    %282 = vmatpush1.bf16.msra.mxu0 %v272
    %283 = vmatprep.subr.bf16.mxu0 0
    %284 = vmatpush1.bf16.msra.mxu0 %v271
    %285 = vmatprep.subr.bf16.mxu0 0
    %286 = vmatpush1.bf16.msra.mxu0 %v270
    %287 = vmatprep.subr.bf16.mxu0 0
    %288 = vmatpush1.bf16.msra.mxu0 %v269
    %289 = vmatprep.subr.bf16.mxu0 0
    %290 = vmatpush1.bf16.msra.mxu0 %v268
    %291 = vmatprep.subr.bf16.mxu0 0
    %292 = vmatpush1.bf16.msra.mxu0 %v267
    %293 = vmatprep.subr.bf16.mxu0 0
    %294 = vmatpush1.bf16.msra.mxu0 %v266
    %295 = vmatprep.subr.bf16.mxu0 0
    %296 = vmatpush1.bf16.msra.mxu0 %v265
    %297 = vmatprep.subr.bf16.mxu0 0
    %298 = vmatpush2.bf16.msra.mxu0 0
    %299 = vmatprep.subr.bf16.mxu0 0
    %300 = vmatpush2.bf16.msra.mxu0 0
    %301 = vmatprep.subr.bf16.mxu0 0
    %302 = vmatpush2.bf16.msra.mxu0 0
    %303 = vmatprep.subr.bf16.mxu0 0
    %304 = vmatpush2.bf16.msra.mxu0 0
    %305 = vmatprep.subr.bf16.mxu0 0
    %306 = vmatpush2.bf16.msra.mxu0 0
    %307 = vmatprep.subr.bf16.mxu0 0
    %308 = vmatpush2.bf16.msra.mxu0 0
    %309 = vmatprep.subr.bf16.mxu0 0
    %310 = vmatpush2.bf16.msra.mxu0 0
    %311 = vmatprep.subr.bf16.mxu0 0
    %312 = vmatpush2.bf16.msra.mxu0 0
    %313 = vmatprep.mubr.bf16.mxu0 0
    %314 = vmatmul.mubr.bf16.gmra.mxu0 %v216
    %v315 = vpop.f32.mrf.mxu0
    %v316 = vadd.f32 0.0, %v315
    %v317 = vpop.f32.mrf.mxu0
    %v318 = vpop.f32.mrf.mxu0
    %v319 = vadd.f32 0.0, %v318
    %v320 = vpop.f32.mrf.mxu0
    %321 = vdwg.mxu0
    %v322 = vadd.f32 %v214, %v316
    %v323 = vadd.f32 %v215, %v319
    %324 = vst [vmem:[#allocation8] sm:$0xff] %v322
    %325 = vst [vmem:[#allocation8 + $0x8] sm:$0xff] %v323
    // Predicated region
    $region38: #{tpu_custom_call.1} parent=1 // pred_check
      _
    $region39: #{tpu_custom_call.1} parent=1 // pred_check_branch
      %327 = sbr.rel (0) target = $region41
    $region40: #{tpu_custom_call.1} parent=1 // pred_region
      %s329 = ssub.s32 256, 256
      %330 = vsyncadd [#allocation4], %s329
      %s331 = sshll.u32 [#allocation8], 4
      %s332 = int_to_ptr.vmem [resolvable:$true] %s331
      %337 = dma.vmem_to_hbm [thread:$0]  %s332, 256, %s5, [#allocation4], 128, 128, 8
    $region41: #{tpu_custom_call.1} parent=1 // pred_fallthru
      _
    // Predicated region
    $region42: #{tpu_custom_call.1} parent=1 // pred_check
      _
    $region43: #{tpu_custom_call.1} parent=1 // pred_check_branch
      %339 = sbr.rel (0) target = $region45
    $region44: #{tpu_custom_call.1} parent=1 // pred_region
      %340 = dma.done [#allocation4], 256
    $region45: #{tpu_custom_call.1} parent=1 // pred_fallthru
      _
    %341 = vsyncpa [#allocation3], 1
    %342 = vsyncpa [#allocation6], 1
    %343 = vsyncpa [#allocation4], 1

</llo_original>
